<compile_context>
chip_gen: v7x
topology: tpu7x:2x2x1
jax: 0.10.0
libtpu: 0.0.40
codegen_flags: <defaults>
</compile_context>

<pallas_src>
import functools

import jax
import jax.numpy as jnp
from jax.experimental import pallas as pl
from jax.experimental.pallas import tpu as pltpu


def _round_up(x, m):
    return ((x + m - 1) // m) * m


# ----------------------------------------------------------------------------
# Kernel body
# ----------------------------------------------------------------------------
def _pwff_kernel(x_ref, w1_ref, b1_ref, w2_ref, ln_ref, o_ref, *, eps):
    # First 1x1 conv (== linear over channels) + ReLU. bf16 MXU inputs, f32 acc.
    h = jnp.dot(x_ref[...].astype(jnp.bfloat16), w1_ref[...],
                preferred_element_type=jnp.float32)
    h = jnp.maximum(h + b1_ref[...], 0.0)                       # (tm, d_hid) f32

    # Second 1x1 conv + bias + residual.  x is re-read from VMEM for the residual
    # instead of keeping a full f32 tile live across both matmuls.
    ln = ln_ref[...]                                            # (3, d_in): b2, gamma, beta
    out = jnp.dot(h.astype(jnp.bfloat16), w2_ref[...],
                  preferred_element_type=jnp.float32)
    out = out + ln[0:1] + x_ref[...].astype(jnp.float32)        # (tm, d_in) f32

    # TODO(synk): dropout is identity at inference; no stochastic masking applied.

    # LayerNorm over the last (real, unpadded) channel dim.
    inv_d = 1.0 / out.shape[-1]
    mean = jnp.sum(out, axis=-1, keepdims=True) * inv_d
    cen = out - mean
    var = jnp.sum(cen * cen, axis=-1, keepdims=True) * inv_d
    y = cen * jax.lax.rsqrt(var + eps) * ln[1:2] + ln[2:3]
    o_ref[...] = y.astype(o_ref.dtype)


# ----------------------------------------------------------------------------
# One-time parameter prep (hoisted out of the per-call path)
# ----------------------------------------------------------------------------
def prepare_pwff_params(w1, b1, w2, b2, gamma, beta):
    """Cast weights to bf16 once and pack the LayerNorm-side vectors.

    w1: (d_in, d_hid), b1: (d_hid,)   -- Conv1d(d_in->d_hid, 1) weight^T / bias
    w2: (d_hid, d_in), b2: (d_in,)    -- Conv1d(d_hid->d_in, 1) weight^T / bias
    gamma, beta: (d_in,)              -- LayerNorm affine params
    """
    d_in, d_hid = w1.shape
    return dict(
        w1=jnp.asarray(w1, jnp.bfloat16),                       # (d_in, d_hid)
        w2=jnp.asarray(w2, jnp.bfloat16),                       # (d_hid, d_in)
        b1=jnp.asarray(b1, jnp.float32).reshape(1, d_hid),      # (1, d_hid)
        ln=jnp.stack([b2, gamma, beta]).astype(jnp.float32),    # (3, d_in)
    )


# ----------------------------------------------------------------------------
# VMEM budgeting + row-tile selection
# ----------------------------------------------------------------------------
_VMEM_BUDGET = 24 * (1 << 20)   # conservative across v5e / v6e / v7x


def _vmem_bytes(tm, d_in, d_hid):
    x_buf = 2 * tm * d_in * 4                                   # double-buffered x tile (f32)
    out_buf = 2 * tm * d_in * 4                                 # double-buffered out tile (f32)
    w_buf = 2 * d_in * d_hid * 2 * 2                            # W1 + W2, bf16, single-buffered
    vec_buf = 2 * 8 * (_round_up(d_hid, 128) + _round_up(d_in, 128)) * 4
    h_live = tm * d_hid * 4                                     # f32 hidden intermediate
    casts = tm * d_in * 2 + tm * d_hid * 2                      # bf16 copies fed to the MXU
    return x_buf + out_buf + w_buf + vec_buf + h_live + casts


def _choose_tm(m_rows, d_in, d_hid):
    tm = min(512, _round_up(m_rows, 8))
    # Shrink until the tile fits the VMEM budget (handles large d_hid without
    # needing an in-kernel hidden-dim split).
    while tm > 8 and _vmem_bytes(tm, d_in, d_hid) > _VMEM_BUDGET:
        tm = max(8, _round_up(tm // 2, 8))
    # Prefer >= 2 grid steps so the "parallel" row axis can shard across the two
    # TensorCores on v7x instead of leaving one idle.
    while tm > 8 and pl.cdiv(m_rows, tm) < 2:
        tm = max(8, _round_up(tm // 2, 8))
    return tm


# ----------------------------------------------------------------------------
# Forward wrapper
# ----------------------------------------------------------------------------
def positionwise_feed_forward(x, params, *, eps=1e-5, tm=None):
    """x: (B, L, d_in). Returns (B, L, d_in) with x.dtype."""
    B, L, d_in = x.shape
    d_hid = params["w1"].shape[1]
    M = B * L

    if tm is None:
        tm = _choose_tm(M, d_in, d_hid)
    grid = pl.cdiv(M, tm)   # partial last row-tile handled by Pallas (masked writeback)

    est = _vmem_bytes(tm, d_in, d_hid)
    vmem_limit = int(min(48 << 20, max(16 << 20, est * 3 // 2)))

    # Constant operands: same block every grid step -> single-buffer them.
    def _const_spec(shape):
        return pl.BlockSpec(shape, lambda i: (0, 0), pipeline_mode=pl.Buffered(1))

    x2 = x.reshape(M, d_in)   # contiguous reshape; free under jit

    out = pl.pallas_call(
        functools.partial(_pwff_kernel, eps=eps),
        out_shape=jax.ShapeDtypeStruct((M, d_in), x.dtype),
        grid_spec=pl.GridSpec(
            grid=(grid,),
            in_specs=[
                pl.BlockSpec((tm, d_in), lambda i: (i, 0)),     # x rows (streaming)
                _const_spec((d_in, d_hid)),                     # W1 (bf16)
                _const_spec((1, d_hid)),                        # b1
                _const_spec((d_hid, d_in)),                     # W2 (bf16)
                _const_spec((3, d_in)),                         # [b2; gamma; beta]
            ],
            out_specs=pl.BlockSpec((tm, d_in), lambda i: (i, 0)),
        ),
        compiler_params=pltpu.CompilerParams(
            dimension_semantics=("parallel",),
            vmem_limit_bytes=vmem_limit),
    )(x2, params["w1"], params["b1"], params["w2"], params["ln"])

    return out.reshape(B, L, d_in)


# ----------------------------------------------------------------------------
# Reference + self-test
# ----------------------------------------------------------------------------
def _reference(x, w1, b1, w2, b2, gamma, beta, eps=1e-5):
    h = jnp.maximum(jnp.einsum("bld,dh->blh", x, w1) + b1, 0.0)
    out = jnp.einsum("blh,hd->bld", h, w2) + b2 + x
    mean = jnp.mean(out, axis=-1, keepdims=True)
    var = jnp.mean((out - mean) ** 2, axis=-1, keepdims=True)
    return (out - mean) * jax.lax.rsqrt(var + eps) * gamma + beta


if __name__ == "__main__":
    B, L, d_in, d_hid = 2, 8, 32, 64

    key = jax.random.PRNGKey(0)
    kx, k1, kb1, k2, kb2 = jax.random.split(key, 5)

    x = jax.random.normal(kx, (B, L, d_in), dtype=jnp.float32)

    # Parameter shapes follow nn.Conv1d(d_in, d_hid, 1) / nn.LayerNorm(d_in).
    w1 = jax.random.normal(k1, (d_in, d_hid), dtype=jnp.float32) * 0.1   # w_1 weight^T
    b1 = jax.random.normal(kb1, (d_hid,), dtype=jnp.float32) * 0.1
    w2 = jax.random.normal(k2, (d_hid, d_in), dtype=jnp.float32) * 0.1   # w_2 weight^T
    b2 = jax.random.normal(kb2, (d_in,), dtype=jnp.float32) * 0.1
    gamma = jnp.ones((d_in,), dtype=jnp.float32)                          # LayerNorm weight
    beta = jnp.zeros((d_in,), dtype=jnp.float32)                          # LayerNorm bias

    # One-time parameter prep (bf16 weights, packed LN vectors) — not per call.
    params = prepare_pwff_params(w1, b1, w2, b2, gamma, beta)

    fwd = jax.jit(lambda xx, pp: positionwise_feed_forward(xx, pp))
    y = fwd(x, params)
    jax.block_until_ready(y)

    # bf16 MXU inputs => compare against the f32 reference with a loose tolerance.
    y_ref = _reference(x, w1, b1, w2, b2, gamma, beta)
    assert y.shape == y_ref.shape
    assert jnp.allclose(y, y_ref, atol=3e-2, rtol=3e-2), "mismatch vs reference"

    print("KERNEL_OK")
</pallas_src>

<mosaic_0001>
module attributes {stable_mosaic.version = 11 : i64} {
  func.func @_pwff_kernel(%arg0: i32, %arg1: memref<8x32xf32, #tpu.memory_space<vmem>>, %arg2: memref<32x64xbf16, #tpu.memory_space<vmem>>, %arg3: memref<1x64xf32, #tpu.memory_space<vmem>>, %arg4: memref<64x32xbf16, #tpu.memory_space<vmem>>, %arg5: memref<3x32xf32, #tpu.memory_space<vmem>>, %arg6: memref<8x32xf32, #tpu.memory_space<vmem>>) attributes {dimension_semantics = [#tpu.dimension_semantics<parallel>], iteration_bounds = array<i64: 2>, scalar_prefetch = 0 : i64, scratch_operands = 0 : i64, tpu.core_type = #tpu.core_type<tc>, window_params = [{transform_indices = @transform_0, window_bounds = array<i64: 8, 32>}, {pipeline_mode = #tpu.pipeline_mode<synchronous>, transform_indices = @transform_1, window_bounds = array<i64: 32, 64>}, {pipeline_mode = #tpu.pipeline_mode<synchronous>, transform_indices = @transform_2, window_bounds = array<i64: 1, 64>}, {pipeline_mode = #tpu.pipeline_mode<synchronous>, transform_indices = @transform_3, window_bounds = array<i64: 64, 32>}, {pipeline_mode = #tpu.pipeline_mode<synchronous>, transform_indices = @transform_4, window_bounds = array<i64: 3, 32>}, {transform_indices = @transform_5, window_bounds = array<i64: 8, 32>}]} {
    %c0 = arith.constant 0 : index
    %c0_0 = arith.constant 0 : index
    %0 = vector.load %arg1[%c0, %c0_0] : memref<8x32xf32, #tpu.memory_space<vmem>>, vector<8x32xf32>
    %1 = arith.truncf %0 : vector<8x32xf32> to vector<8x32xbf16>
    %c0_1 = arith.constant 0 : index
    %c0_2 = arith.constant 0 : index
    %2 = vector.load %arg2[%c0_1, %c0_2] : memref<32x64xbf16, #tpu.memory_space<vmem>>, vector<32x64xbf16>
    %cst = arith.constant dense<0.000000e+00> : vector<8x64xf32>
    %3 = tpu.matmul %1, %2, %cst {dimension_numbers = #tpu.dot_dimension_numbers<[1], [0], [0], [1], [0, 0, 1, 1], [], []>} : vector<8x32xbf16>, vector<32x64xbf16>, vector<8x64xf32> -> vector<8x64xf32>
    %c0_3 = arith.constant 0 : index
    %c0_4 = arith.constant 0 : index
    %4 = vector.load %arg3[%c0_3, %c0_4] : memref<1x64xf32, #tpu.memory_space<vmem>>, vector<1x64xf32>
    %5 = vector.broadcast %4 : vector<1x64xf32> to vector<8x64xf32>
    %6 = arith.addf %3, %5 : vector<8x64xf32>
    %cst_5 = arith.constant 0.000000e+00 : f32
    %7 = vector.broadcast %cst_5 : f32 to vector<8x64xf32>
    %8 = arith.maximumf %6, %7 : vector<8x64xf32>
    %c0_6 = arith.constant 0 : index
    %c0_7 = arith.constant 0 : index
    %9 = vector.load %arg5[%c0_6, %c0_7] : memref<3x32xf32, #tpu.memory_space<vmem>>, vector<3x32xf32>
    %10 = arith.truncf %8 : vector<8x64xf32> to vector<8x64xbf16>
    %c0_8 = arith.constant 0 : index
    %c0_9 = arith.constant 0 : index
    %11 = vector.load %arg4[%c0_8, %c0_9] : memref<64x32xbf16, #tpu.memory_space<vmem>>, vector<64x32xbf16>
    %cst_10 = arith.constant dense<0.000000e+00> : vector<8x32xf32>
    %12 = tpu.matmul %10, %11, %cst_10 {dimension_numbers = #tpu.dot_dimension_numbers<[1], [0], [0], [1], [0, 0, 1, 1], [], []>} : vector<8x64xbf16>, vector<64x32xbf16>, vector<8x32xf32> -> vector<8x32xf32>
    %13 = vector.extract_strided_slice %9 {offsets = [0, 0], sizes = [1, 32], strides = [1, 1]} : vector<3x32xf32> to vector<1x32xf32>
    %14 = vector.broadcast %13 : vector<1x32xf32> to vector<8x32xf32>
    %15 = arith.addf %12, %14 : vector<8x32xf32>
    %c0_11 = arith.constant 0 : index
    %c0_12 = arith.constant 0 : index
    %16 = vector.load %arg1[%c0_11, %c0_12] : memref<8x32xf32, #tpu.memory_space<vmem>>, vector<8x32xf32>
    %17 = arith.addf %15, %16 : vector<8x32xf32>
    %cst_13 = arith.constant dense<0.000000e+00> : vector<8xf32>
    %18 = vector.multi_reduction <add>, %17, %cst_13 [1] : vector<8x32xf32> to vector<8xf32>
    %19 = vector.shape_cast %18 : vector<8xf32> to vector<8x1xf32>
    %cst_14 = arith.constant 3.125000e-02 : f32
    %20 = vector.broadcast %cst_14 : f32 to vector<8x1xf32>
    %21 = arith.mulf %19, %20 : vector<8x1xf32>
    %22 = vector.broadcast %21 : vector<8x1xf32> to vector<8x32xf32>
    %23 = arith.subf %17, %22 : vector<8x32xf32>
    %24 = arith.mulf %23, %23 : vector<8x32xf32>
    %cst_15 = arith.constant dense<0.000000e+00> : vector<8xf32>
    %25 = vector.multi_reduction <add>, %24, %cst_15 [1] : vector<8x32xf32> to vector<8xf32>
    %26 = vector.shape_cast %25 : vector<8xf32> to vector<8x1xf32>
    %cst_16 = arith.constant 3.125000e-02 : f32
    %27 = vector.broadcast %cst_16 : f32 to vector<8x1xf32>
    %28 = arith.mulf %26, %27 : vector<8x1xf32>
    %cst_17 = arith.constant 9.99999974E-6 : f32
    %29 = vector.broadcast %cst_17 : f32 to vector<8x1xf32>
    %30 = arith.addf %28, %29 : vector<8x1xf32>
    %31 = math.rsqrt %30 : vector<8x1xf32>
    %32 = vector.broadcast %31 : vector<8x1xf32> to vector<8x32xf32>
    %33 = arith.mulf %23, %32 : vector<8x32xf32>
    %34 = vector.extract_strided_slice %9 {offsets = [1, 0], sizes = [1, 32], strides = [1, 1]} : vector<3x32xf32> to vector<1x32xf32>
    %35 = vector.broadcast %34 : vector<1x32xf32> to vector<8x32xf32>
    %36 = arith.mulf %33, %35 : vector<8x32xf32>
    %37 = vector.extract_strided_slice %9 {offsets = [2, 0], sizes = [1, 32], strides = [1, 1]} : vector<3x32xf32> to vector<1x32xf32>
    %38 = vector.broadcast %37 : vector<1x32xf32> to vector<8x32xf32>
    %39 = arith.addf %36, %38 : vector<8x32xf32>
    %c0_18 = arith.constant 0 : index
    %c0_19 = arith.constant 0 : index
    %40 = vector.load %arg6[%c0_18, %c0_19] : memref<8x32xf32, #tpu.memory_space<vmem>>, vector<8x32xf32>
    tpu.vector_store %arg6[%c0_18, %c0_19], %39 {strides = array<i32>} : memref<8x32xf32, #tpu.memory_space<vmem>>, vector<8x32xf32>,
    return
  }
  func.func @transform_0(%arg0: i32) -> (i32, i32) {
    %c0_i32 = arith.constant 0 : i32
    %c0_i32_0 = arith.constant 0 : i32
    return %arg0, %c0_i32 : i32, i32
  }
  func.func @transform_1(%arg0: i32) -> (i32, i32) {
    %c0_i32 = arith.constant 0 : i32
    %c0_i32_0 = arith.constant 0 : i32
    %c0_i32_1 = arith.constant 0 : i32
    return %c0_i32, %c0_i32_0 : i32, i32
  }
  func.func @transform_2(%arg0: i32) -> (i32, i32) {
    %c0_i32 = arith.constant 0 : i32
    %c0_i32_0 = arith.constant 0 : i32
    %c0_i32_1 = arith.constant 0 : i32
    return %c0_i32, %c0_i32_0 : i32, i32
  }
  func.func @transform_3(%arg0: i32) -> (i32, i32) {
    %c0_i32 = arith.constant 0 : i32
    %c0_i32_0 = arith.constant 0 : i32
    %c0_i32_1 = arith.constant 0 : i32
    return %c0_i32, %c0_i32_0 : i32, i32
  }
  func.func @transform_4(%arg0: i32) -> (i32, i32) {
    %c0_i32 = arith.constant 0 : i32
    %c0_i32_0 = arith.constant 0 : i32
    %c0_i32_1 = arith.constant 0 : i32
    return %c0_i32, %c0_i32_0 : i32, i32
  }
  func.func @transform_5(%arg0: i32) -> (i32, i32) {
    %c0_i32 = arith.constant 0 : i32
    %c0_i32_0 = arith.constant 0 : i32
    return %arg0, %c0_i32 : i32, i32
  }
}

</mosaic_0001>

<llo_original>
// kernel: _lambda_.1
$region0: #{_lambda_.1}
  #allocation0 [shape = 'u32[]', space=smem, size = 0x4, offset = 0x4, fixed_abs, tag = 'smem constant byte address 0x4 - core index']
  #allocation1 [shape = 'u32[144,128]{1,0:T(1,128)}', space=vmem, size = 0x12000, scoped, tag = 'internal scratch']
  %s0 = inlined_call_operand.vmem [shape: f32[16,32], index: 0, kind: input, shape index: {}]
  %s1 = inlined_call_operand.vmem [shape: bf16[32,64], index: 1, kind: input, shape index: {}]
  %s2 = inlined_call_operand.vmem [shape: f32[1,64], index: 2, kind: input, shape index: {}]
  %s3 = inlined_call_operand.vmem [shape: bf16[64,32], index: 3, kind: input, shape index: {}]
  %s4 = inlined_call_operand.vmem [shape: f32[3,32], index: 4, kind: input, shape index: {}]
  %s5 = inlined_call_operand.hbm [shape: f32[16,32], index: 5, kind: output, shape index: {}]
  %s6 = sld [smem:[#allocation0]]
  $region53: #{_lambda_.1} parent=0
    _
  %s8 = ssub.s32 1, %s6
  %s9 = scalar_select 0, %s8, %s6
  $region1: #{_lambda_.1} parent=0
    #allocation2 [shape = 'u8[8192]{0}', space=vmem, size = 0x2000, scoped, tag = 'output window, operand 0']
    #allocation3 [shape = 's32[2]{0}', space=sflag, size = 0x8, scoped, tag = 'scoped memory for _lambda_.1']
    %10 = vsyncpa [#allocation3], 0
    %s11 = scalar_lea.sflag [#allocation3], 1
    %12 = vsyncpa %s11, 0
    loop: start=0, step=1, limit=4
    $region2: #{_lambda_.1} parent=1 // loop_pre_header
      _
    $region3: #{_lambda_.1} parent=1 // loop_header
      %s14 = sphi 0, %s18
      %p15 = scmp.ge.s32.totalorder %s14, 4
      %s24 = sphi 0, %s26
      %s27 = sphi 0, %s24
      %s28 = sphi 0, %s27
      %s44 = sphi 0, %s28
      %s48 = sphi 0, %s48
      %s50 = sphi 0, %s48
      %s51 = sphi 0, %s50
      %s65 = sphi 0, %s51
      %s69 = sphi 0, %s69
      %s71 = sphi 0, %s69
      %s72 = sphi 0, %s71
      %s86 = sphi 0, %s72
      %s90 = sphi 0, %s90
      %s92 = sphi 0, %s90
      %s93 = sphi 0, %s92
      %s107 = sphi 0, %s93
      %s111 = sphi 0, %s111
      %s113 = sphi 0, %s111
      %s114 = sphi 0, %s113
      %s128 = sphi 0, %s114
      %s134 = sphi 0, %s136
      %s137 = sphi 0, %s134
      %s138 = sphi 0, %s137
      %s154 = sphi 0, %s138
    $region4: #{_lambda_.1} parent=1 // loop_header_branch
      %17 = sbr.rel (%p15) target = $region8
    $region5: #{_lambda_.1} parent=1 // loop_body
      %s19 = ssub.s32 %s14, 1
      %s20 = ssub.s32 %s14, 2
      %s21 = sadd.s32 %s14, 1
      %s22 = ssub.s32 %s14, %s21
      %p23 = scmp.eq.s32.totalorder %s22, 0
      %s25 = sadd.s32 %s24, 1
      %s26 = scalar_select %p23, %s24, %s25
      %p29 = pneg %p23
      %p30 = scmp.eq.s32.totalorder %s14, 1
      %p31 = por %p29, %p30
      %p32 = scmp.ne.s32.totalorder %s24, %s27
      %p33 = scmp.eq.s32.totalorder %s14, 0
      %p34 = por %p32, %p33
      %p35 = scmp.ne.s32.totalorder %s24, %s27
      %p36 = scmp.eq.s32.totalorder %s19, 1
      %p37 = por %p35, %p36
      %p38 = scmp.ne.s32.totalorder %s27, %s28
      %p39 = scmp.eq.s32.totalorder %s19, 0
      %p40 = por %p38, %p39
      %p41 = scmp.ne.s32.totalorder %s27, %s28
      %p42 = scmp.eq.s32.totalorder %s20, 1
      %p43 = por %p41, %p42
      %p45 = scmp.ne.s32.totalorder %s28, %s44
      %p46 = scmp.eq.s32.totalorder %s20, 0
      %p47 = por %p45, %p46
      %s49 = sadd.s32 %s48, 1
      %p52 = scmp.eq.s32.totalorder %s14, 1
      %p53 = scmp.ne.s32.totalorder %s48, %s50
      %p54 = scmp.eq.s32.totalorder %s14, 0
      %p55 = por %p53, %p54
      %p56 = scmp.ne.s32.totalorder %s48, %s50
      %p57 = scmp.eq.s32.totalorder %s19, 1
      %p58 = por %p56, %p57
      %p59 = scmp.ne.s32.totalorder %s50, %s51
      %p60 = scmp.eq.s32.totalorder %s19, 0
      %p61 = por %p59, %p60
      %p62 = scmp.ne.s32.totalorder %s50, %s51
      %p63 = scmp.eq.s32.totalorder %s20, 1
      %p64 = por %p62, %p63
      %p66 = scmp.ne.s32.totalorder %s51, %s65
      %p67 = scmp.eq.s32.totalorder %s20, 0
      %p68 = por %p66, %p67
      %s70 = sadd.s32 %s69, 1
      %p73 = scmp.eq.s32.totalorder %s14, 1
      %p74 = scmp.ne.s32.totalorder %s69, %s71
      %p75 = scmp.eq.s32.totalorder %s14, 0
      %p76 = por %p74, %p75
      %p77 = scmp.ne.s32.totalorder %s69, %s71
      %p78 = scmp.eq.s32.totalorder %s19, 1
      %p79 = por %p77, %p78
      %p80 = scmp.ne.s32.totalorder %s71, %s72
      %p81 = scmp.eq.s32.totalorder %s19, 0
      %p82 = por %p80, %p81
      %p83 = scmp.ne.s32.totalorder %s71, %s72
      %p84 = scmp.eq.s32.totalorder %s20, 1
      %p85 = por %p83, %p84
      %p87 = scmp.ne.s32.totalorder %s72, %s86
      %p88 = scmp.eq.s32.totalorder %s20, 0
      %p89 = por %p87, %p88
      %s91 = sadd.s32 %s90, 1
      %p94 = scmp.eq.s32.totalorder %s14, 1
      %p95 = scmp.ne.s32.totalorder %s90, %s92
      %p96 = scmp.eq.s32.totalorder %s14, 0
      %p97 = por %p95, %p96
      %p98 = scmp.ne.s32.totalorder %s90, %s92
      %p99 = scmp.eq.s32.totalorder %s19, 1
      %p100 = por %p98, %p99
      %p101 = scmp.ne.s32.totalorder %s92, %s93
      %p102 = scmp.eq.s32.totalorder %s19, 0
      %p103 = por %p101, %p102
      %p104 = scmp.ne.s32.totalorder %s92, %s93
      %p105 = scmp.eq.s32.totalorder %s20, 1
      %p106 = por %p104, %p105
      %p108 = scmp.ne.s32.totalorder %s93, %s107
      %p109 = scmp.eq.s32.totalorder %s20, 0
      %p110 = por %p108, %p109
      %s112 = sadd.s32 %s111, 1
      %p115 = scmp.eq.s32.totalorder %s14, 1
      %p116 = scmp.ne.s32.totalorder %s111, %s113
      %p117 = scmp.eq.s32.totalorder %s14, 0
      %p118 = por %p116, %p117
      %p119 = scmp.ne.s32.totalorder %s111, %s113
      %p120 = scmp.eq.s32.totalorder %s19, 1
      %p121 = por %p119, %p120
      %p122 = scmp.ne.s32.totalorder %s113, %s114
      %p123 = scmp.eq.s32.totalorder %s19, 0
      %p124 = por %p122, %p123
      %p125 = scmp.ne.s32.totalorder %s113, %s114
      %p126 = scmp.eq.s32.totalorder %s20, 1
      %p127 = por %p125, %p126
      %p129 = scmp.ne.s32.totalorder %s114, %s128
      %p130 = scmp.eq.s32.totalorder %s20, 0
      %p131 = por %p129, %p130
      %s132 = ssub.s32 %s14, %s21
      %p133 = scmp.eq.s32.totalorder %s132, 0
      %s135 = sadd.s32 %s134, 1
      %s136 = scalar_select %p133, %s134, %s135
      %p139 = pneg %p133
      %p140 = scmp.eq.s32.totalorder %s14, 1
      %p141 = por %p139, %p140
      %p142 = scmp.ne.s32.totalorder %s134, %s137
      %p143 = scmp.eq.s32.totalorder %s14, 0
      %p144 = por %p142, %p143
      %p145 = scmp.ne.s32.totalorder %s134, %s137
      %p146 = scmp.eq.s32.totalorder %s19, 1
      %p147 = por %p145, %p146
      %p148 = scmp.ne.s32.totalorder %s137, %s138
      %p149 = scmp.eq.s32.totalorder %s19, 0
      %p150 = por %p148, %p149
      %p151 = scmp.ne.s32.totalorder %s137, %s138
      %p152 = scmp.eq.s32.totalorder %s20, 1
      %p153 = por %p151, %p152
      %p155 = scmp.ne.s32.totalorder %s138, %s154
      %p156 = scmp.eq.s32.totalorder %s20, 0
      %p157 = por %p155, %p156
      %p158 = scmp.le.s32.totalorder 1, %s14
      %p159 = scmp.lt.s32.totalorder %s14, 3
      %p160 = pnand %p158, %p159
      %p161 = pneg %p160
      // Predicated region
      $region9: #{_lambda_.1} parent=5 // pred_check
        _
      $region10: #{_lambda_.1} parent=5 // pred_check_branch
        %163 = sbr.rel (%p160) target = $region12
      $region11: #{_lambda_.1} parent=5 // pred_region
        %s164 = ssub.s32 %s14, 1
        // Predicated region
        $region13: #{_lambda_.1} parent=11 // pred_check
          %p165 = pneg %p61
        $region14: #{_lambda_.1} parent=11 // pred_check_branch
          %167 = sbr.rel (%p165) target = $region16
        $region15: #{_lambda_.1} parent=11 // pred_region
          _
        $region16: #{_lambda_.1} parent=11 // pred_fallthru
          _
        // Predicated region
        $region17: #{_lambda_.1} parent=11 // pred_check
          %p168 = pneg %p82
        $region18: #{_lambda_.1} parent=11 // pred_check_branch
          %170 = sbr.rel (%p168) target = $region20
        $region19: #{_lambda_.1} parent=11 // pred_region
          _
        $region20: #{_lambda_.1} parent=11 // pred_fallthru
          _
        // Predicated region
        $region21: #{_lambda_.1} parent=11 // pred_check
          %p171 = pneg %p103
        $region22: #{_lambda_.1} parent=11 // pred_check_branch
          %173 = sbr.rel (%p171) target = $region24
        $region23: #{_lambda_.1} parent=11 // pred_region
          _
        $region24: #{_lambda_.1} parent=11 // pred_fallthru
          _
        // Predicated region
        $region25: #{_lambda_.1} parent=11 // pred_check
          %p174 = pneg %p124
        $region26: #{_lambda_.1} parent=11 // pred_check_branch
          %176 = sbr.rel (%p174) target = $region28
        $region27: #{_lambda_.1} parent=11 // pred_region
          _
        $region28: #{_lambda_.1} parent=11 // pred_fallthru
          _
      $region12: #{_lambda_.1} parent=5 // pred_fallthru
        _
      %p177 = scmp.lt.s32.totalorder %s14, 2
      // Predicated region
      $region29: #{_lambda_.1} parent=5 // pred_check
        %p178 = pneg %p177
      $region30: #{_lambda_.1} parent=5 // pred_check_branch
        %180 = sbr.rel (%p178) target = $region32
      $region31: #{_lambda_.1} parent=5 // pred_region
        // Predicated region
        $region33: #{_lambda_.1} parent=31 // pred_check
          %p181 = pneg %p34
        $region34: #{_lambda_.1} parent=31 // pred_check_branch
          %183 = sbr.rel (%p181) target = $region36
        $region35: #{_lambda_.1} parent=31 // pred_region
          %p184 = scmp.lt.s32.totalorder %s14, 1
          %s185 = scalar_select %p184, %s14, 1
          %s186 = smul.addr %s185, 8
          %s187 = scalar_lea.vmem %s0, %s186
        $region36: #{_lambda_.1} parent=31 // pred_fallthru
          _
      $region32: #{_lambda_.1} parent=5 // pred_fallthru
        _
      %p188 = scmp.le.s32.totalorder 1, %s14
      %p189 = scmp.lt.s32.totalorder %s14, 3
      %p190 = pnand %p188, %p189
      %p191 = pneg %p190
      // Predicated region
      $region37: #{_lambda_.1} parent=5 // pred_check
        _
      $region38: #{_lambda_.1} parent=5 // pred_check_branch
        %193 = sbr.rel (%p190) target = $region40
      $region39: #{_lambda_.1} parent=5 // pred_region
        %s194 = ssub.s32 %s14, 1
        %p195 = scmp.lt.s32.totalorder %s19, 1
        %s196 = scalar_select %p195, %s19, 1
        %s197 = smul.addr %s196, 8
        %s198 = scalar_lea.vmem %s0, %s197
        %p199 = pneg %p40
        %p200 = pneg %p37
        %p201 = pneg %p61
        %p202 = pneg %p58
        %p203 = pneg %p82
        %p204 = pneg %p79
        %p205 = pneg %p103
        %p206 = pneg %p100
        %p207 = pneg %p124
        %p208 = pneg %p121
        %p209 = pneg %p150
        %p210 = pneg %p147
        %s211 = sand.u32 %s137, 1
        %s212 = scalar_lea.sflag [#allocation3], %s211
        %s213 = sand.u32 %s137, 1
        %s214 = smul.addr %s213, 8
        %s215 = scalar_lea.vmem [#allocation2], %s214
        %p216 = scmp.lt.s32.totalorder %s19, 1
        %s217 = scalar_select %p216, %s19, 1
        %s218 = smul.addr %s217, 8
        %s219 = scalar_lea.vmem %s0, %s218
        %v221 = vld [vmem:[%s219] sm:$0xff]
        %v222 = vpack.c.bf16 %v221, %v221
        %v223 = vld [vmem:[%s1] sm:$0xf]
        %v224 = vld [vmem:[%s1 + $0x4] sm:$0xf]
        %v225 = vld [vmem:[%s1 + $0x8] sm:$0xf]
        %v226 = vld [vmem:[%s1 + $0xc] sm:$0xf]
        %v227 = vld [vmem:[%s2] sm:$0x1]
        %v229 = vlaneseq
        %v230 = vshrl.u32 %v229, 7
        %v231 = vsub.s32 0, %v230
        %v232 = vrot.slane %v227, %v231
        %v238 = vunpack.c.l.b16 %v223
        %v239 = vunpack.c.l.b16 %v224
        %v240 = vunpack.c.l.b16 %v225
        %v241 = vunpack.c.l.b16 %v226
        %v242 = vpack.c.b16 %v239, %v238
        %v243 = vpack.c.b16 %v241, %v240
        %vm246 = vcmask 261120
        %v248 = vsel %vm246, %v222, 0
        %250 = vmatprep.subr.bf16.mxu0 0
        %251 = vmatpush1.bf16.msra.mxu0 %v242
        %252 = vmatprep.subr.bf16.mxu0 0
        %253 = vmatpush1.bf16.msra.mxu0 %v243
        %254 = vmatprep.subr.bf16.mxu0 0
        %255 = vmatpush1.bf16.msra.mxu0 0
        %256 = vmatprep.subr.bf16.mxu0 0
        %257 = vmatpush1.bf16.msra.mxu0 0
        %258 = vmatprep.subr.bf16.mxu0 0
        %259 = vmatpush1.bf16.msra.mxu0 0
        %260 = vmatprep.subr.bf16.mxu0 0
        %261 = vmatpush1.bf16.msra.mxu0 0
        %262 = vmatprep.subr.bf16.mxu0 0
        %263 = vmatpush1.bf16.msra.mxu0 0
        %264 = vmatprep.subr.bf16.mxu0 0
        %265 = vmatpush1.bf16.msra.mxu0 0
        %266 = vmatprep.subr.bf16.mxu0 0
        %267 = vmatpush1.bf16.msra.mxu0 0
        %268 = vmatprep.subr.bf16.mxu0 0
        %269 = vmatpush1.bf16.msra.mxu0 0
        %270 = vmatprep.subr.bf16.mxu0 0
        %271 = vmatpush1.bf16.msra.mxu0 0
        %272 = vmatprep.subr.bf16.mxu0 0
        %273 = vmatpush1.bf16.msra.mxu0 0
        %274 = vmatprep.subr.bf16.mxu0 0
        %275 = vmatpush1.bf16.msra.mxu0 0
        %276 = vmatprep.subr.bf16.mxu0 0
        %277 = vmatpush1.bf16.msra.mxu0 0
        %278 = vmatprep.subr.bf16.mxu0 0
        %279 = vmatpush1.bf16.msra.mxu0 0
        %280 = vmatprep.subr.bf16.mxu0 0
        %281 = vmatpush1.bf16.msra.mxu0 0
        %282 = vmatprep.mubr.bf16.mxu0 0
        %283 = vmatmul.mubr.bf16.gmra.mrb[0].mxu0 %v248
        %v284 = vpop.f32.mrb[0].mxu0
        %v285 = vadd.f32 %v232, %v284
        %v286 = vpop.f32.mrb[0].mxu0
        %v287 = vpop.f32.mrb[0].mxu0
        %v288 = vpop.f32.mrb[0].mxu0
        %289 = vdwg.mxu0
        %v290 = vmax.f32 %v285, 0.0
        %v291 = vld [vmem:[%s4] sm:$0x7]
        %v292 = vpack.c.bf16 %v290, %v290
        %v293 = vld [vmem:[%s3] sm:$0xf]
        %v294 = vld [vmem:[%s3 + $0x4] sm:$0xf]
        %v295 = vld [vmem:[%s3 + $0x8] sm:$0xf]
        %v296 = vld [vmem:[%s3 + $0xc] sm:$0xf]
        %v297 = vld [vmem:[%s3 + $0x10] sm:$0xf]
        %v298 = vld [vmem:[%s3 + $0x14] sm:$0xf]
        %v299 = vld [vmem:[%s3 + $0x18] sm:$0xf]
        %v300 = vld [vmem:[%s3 + $0x1c] sm:$0xf]
        %v301 = vlaneseq
        %v302 = vshrl.u32 %v301, 7
        %v303 = vsub.s32 0, %v302
        %v304 = vrot.slane %v291, %v303
        %v313 = vunpack.c.l.b16 %v293
        %v314 = vunpack.c.l.b16 %v294
        %v315 = vunpack.c.l.b16 %v295
        %v316 = vunpack.c.l.b16 %v296
        %v317 = vunpack.c.l.b16 %v297
        %v318 = vunpack.c.l.b16 %v298
        %v319 = vunpack.c.l.b16 %v299
        %v320 = vunpack.c.l.b16 %v300
        %v321 = vpack.c.b16 %v314, %v313
        %v322 = vpack.c.b16 %v316, %v315
        %v323 = vpack.c.b16 %v318, %v317
        %v324 = vpack.c.b16 %v320, %v319
        %vm329 = vcmask 523264
        %v331 = vsel %vm329, %v292, 0
        %333 = vmatprep.subr.bf16.mxu0 0
        %334 = vmatpush1.bf16.msra.mxu0 %v321
        %335 = vmatprep.subr.bf16.mxu0 0
        %336 = vmatpush1.bf16.msra.mxu0 %v322
        %337 = vmatprep.subr.bf16.mxu0 0
        %338 = vmatpush1.bf16.msra.mxu0 %v323
        %339 = vmatprep.subr.bf16.mxu0 0
        %340 = vmatpush1.bf16.msra.mxu0 %v324
        %341 = vmatprep.subr.bf16.mxu0 0
        %342 = vmatpush1.bf16.msra.mxu0 0
        %343 = vmatprep.subr.bf16.mxu0 0
        %344 = vmatpush1.bf16.msra.mxu0 0
        %345 = vmatprep.subr.bf16.mxu0 0
        %346 = vmatpush1.bf16.msra.mxu0 0
        %347 = vmatprep.subr.bf16.mxu0 0
        %348 = vmatpush1.bf16.msra.mxu0 0
        %349 = vmatprep.subr.bf16.mxu0 0
        %350 = vmatpush1.bf16.msra.mxu0 0
        %351 = vmatprep.subr.bf16.mxu0 0
        %352 = vmatpush1.bf16.msra.mxu0 0
        %353 = vmatprep.subr.bf16.mxu0 0
        %354 = vmatpush1.bf16.msra.mxu0 0
        %355 = vmatprep.subr.bf16.mxu0 0
        %356 = vmatpush1.bf16.msra.mxu0 0
        %357 = vmatprep.subr.bf16.mxu0 0
        %358 = vmatpush1.bf16.msra.mxu0 0
        %359 = vmatprep.subr.bf16.mxu0 0
        %360 = vmatpush1.bf16.msra.mxu0 0
        %361 = vmatprep.subr.bf16.mxu0 0
        %362 = vmatpush1.bf16.msra.mxu0 0
        %363 = vmatprep.subr.bf16.mxu0 0
        %364 = vmatpush1.bf16.msra.mxu0 0
        %365 = vmatprep.mubr.bf16.mxu0 0
        %366 = vmatmul.mubr.bf16.gmra.mrb[0].mxu0 %v331
        %v367 = vpop.f32.mrb[0].mxu0
        %v368 = vadd.f32 %v304, %v367
        %v369 = vpop.f32.mrb[0].mxu0
        %v370 = vpop.f32.mrb[0].mxu0
        %v371 = vpop.f32.mrb[0].mxu0
        %372 = vdwg.mxu0
        %v373 = vadd.f32 %v368, %v221
        %v374 = vsel %vm246, %v373, 0.0
        %375 = vadd.xlane.f32.xlu0 %v374
        %v376 = vpop.xlane.xlu0 %375
        %v377 = vmul.f32 %v376, 0.03125
        %v378 = vsub.f32 %v373, %v377
        %v379 = vmul.f32 %v378, %v378
        %v380 = vsel %vm246, %v379, 0.0
        %381 = vadd.xlane.f32.xlu0 %v380
        %v382 = vpop.xlane.xlu0 %381
        %v383 = vmul.f32 %v382, 0.03125
        %v384 = vadd.f32 %v383, 1e-05
        %v385 = vrsqrt.pop %v384
        %v386 = vmul.f32 %v378, %v385
        %v387 = vlaneseq
        %v388 = vshrl.u32 %v387, 7
        %v389 = vsub.s32 1, %v388
        %v390 = vrot.slane %v291, %v389
        %v391 = vmul.f32 %v386, %v390
        %v392 = vlaneseq
        %v393 = vshrl.u32 %v392, 7
        %v394 = vsub.s32 2, %v393
        %v395 = vrot.slane %v291, %v394
        %v396 = vadd.f32 %v391, %v395
        %397 = vst.msk [vmem:[%s215] sm:$0xff] %vm246, %v396
        %s398 = sand.u32 %s137, 1
        %s399 = scalar_lea.sflag [#allocation3], %s398
        %s400 = sand.u32 %s137, 1
        %s401 = smul.addr %s400, 8
        %s402 = scalar_lea.vmem [#allocation2], %s401
        // Predicated region
        $region41: #{_lambda_.1} parent=39 // pred_check
          %p403 = pneg %p147
        $region42: #{_lambda_.1} parent=39 // pred_check_branch
          %405 = sbr.rel (%p403) target = $region44
        $region43: #{_lambda_.1} parent=39 // pred_region
          %s407 = ssub.s32 128, 128
          %408 = vsyncadd %s399, %s407
          %s409 = smul.addr %s19, 128
          %s410 = scalar_lea.hbm %s5, %s409
          %s412 = sshll.u32 %s402, 4
          %s413 = int_to_ptr.vmem [resolvable:$true] %s412
          %415 = dma.vmem_to_hbm [thread:$0]  %s413, 128, %s410, %s399
        $region44: #{_lambda_.1} parent=39 // pred_fallthru
          _
      $region40: #{_lambda_.1} parent=5 // pred_fallthru
        _
      %p416 = scmp.le.s32.totalorder 2, %s14
      // Predicated region
      $region45: #{_lambda_.1} parent=5 // pred_check
        %p417 = pneg %p416
      $region46: #{_lambda_.1} parent=5 // pred_check_branch
        %419 = sbr.rel (%p417) target = $region48
      $region47: #{_lambda_.1} parent=5 // pred_region
        %s420 = ssub.s32 %s14, 2
        // Predicated region
        $region49: #{_lambda_.1} parent=47 // pred_check
          %p421 = pneg %p153
        $region50: #{_lambda_.1} parent=47 // pred_check_branch
          %423 = sbr.rel (%p421) target = $region52
        $region51: #{_lambda_.1} parent=47 // pred_region
          %s424 = sand.u32 %s138, 1
          %s425 = scalar_lea.sflag [#allocation3], %s424
          %s426 = sand.u32 %s138, 1
          %s427 = smul.addr %s426, 8
          %s428 = scalar_lea.vmem [#allocation2], %s427
          %429 = dma.done %s425, 128
        $region52: #{_lambda_.1} parent=47 // pred_fallthru
          _
      $region48: #{_lambda_.1} parent=5 // pred_fallthru
        _
    $region6: #{_lambda_.1} parent=1 // loop_footer
      %s18 = sadd.s32 1, %s14
    $region7: #{_lambda_.1} parent=1 // loop_footer_branch
      %13 = sbr.rel target = $region3
    $region8: #{_lambda_.1} parent=1 // loop_exit
      _
    %430 = vsyncpa [#allocation3], 1
    %s431 = scalar_lea.sflag [#allocation3], 1
    %432 = vsyncpa %s431, 1

</llo_original>
